<compile_context>
chip_gen: v7x
topology: tpu7x:2x2x1
jax: 0.10.0
libtpu: 0.0.40
codegen_flags: <defaults>
</compile_context>

<pallas_src>
import functools

import jax
import jax.numpy as jnp
from jax.experimental import pallas as pl
from jax.experimental.pallas import tpu as pltpu

# Tile sizes (MXU/lane aligned on v5e/v6e/v7x); padded dims are multiples of these.
_TM = 128   # destination-node rows per tile
_TN = 128   # output-feature columns per tile (matmul kernel)
_TK = 128   # reduction tile (features for X@W, source nodes for A@XW)

# Scoped VMEM: generous but still fits v7x's 64 MiB physical VMEM with headroom.
_VMEM_LIMIT_BYTES = 48 * 1024 * 1024


def _round_up(x, m):
    return ((x + m - 1) // m) * m


# ---------------------------------------------------------------------------
# Kernel 1: row-scaled matmul      out = dinv ⊙ (X @ W)
# grid = (M/tm, N/tn, K/tk); f32 VMEM accumulator; scale + cast on last K step.
# ---------------------------------------------------------------------------
def _matmul_rowscale_kernel(x_ref, w_ref, s_ref, o_ref, acc_ref):
    @pl.when(pl.program_id(2) == 0)
    def _init():
        acc_ref[...] = jnp.zeros_like(acc_ref)

    acc_ref[...] += jnp.dot(x_ref[...], w_ref[...],
                            preferred_element_type=jnp.float32)

    @pl.when(pl.program_id(2) == pl.num_programs(2) - 1)
    def _finalize():
        o_ref[...] = (acc_ref[...] * s_ref[...]).astype(o_ref.dtype)


def _matmul_rowscale(x, w, dinv, out_dtype):
    M, K = x.shape
    _, N = w.shape
    grid = (M // _TM, N // _TN, K // _TK)
    return pl.pallas_call(
        _matmul_rowscale_kernel,
        out_shape=jax.ShapeDtypeStruct((M, N), out_dtype),
        grid_spec=pltpu.PrefetchScalarGridSpec(
            num_scalar_prefetch=0,
            grid=grid,
            in_specs=[
                pl.BlockSpec((_TM, _TK), lambda i, j, k: (i, k)),
                pl.BlockSpec((_TK, _TN), lambda i, j, k: (k, j)),
                pl.BlockSpec((_TM, 1), lambda i, j, k: (i, 0)),
            ],
            out_specs=pl.BlockSpec((_TM, _TN), lambda i, j, k: (i, j)),
            scratch_shapes=[pltpu.VMEM((_TM, _TN), jnp.float32)],
        ),
        compiler_params=pltpu.CompilerParams(
            dimension_semantics=("parallel", "parallel", "arbitrary"),
            vmem_limit_bytes=_VMEM_LIMIT_BYTES),
    )(x, w, dinv)


# ---------------------------------------------------------------------------
# Kernel 2: normalized aggregation  out = act( dinv ⊙ (A @ XWs) + b )
# grid = (M/tm, N_src/tk); adjacency row tiles streamed, f32 accumulator,
# dst-side dinv / bias / ReLU applied only on the last reduction step.
# Output feature width (<= 512 in the real module) kept as one resident block.
# ---------------------------------------------------------------------------
def _aggregate_kernel(adj_ref, xw_ref, dinv_ref, b_ref, o_ref, acc_ref, *, activate):
    k = pl.program_id(1)

    @pl.when(k == 0)
    def _init():
        acc_ref[...] = jnp.zeros_like(acc_ref)

    acc_ref[...] += jnp.dot(adj_ref[...], xw_ref[...],
                            preferred_element_type=jnp.float32)

    @pl.when(k == pl.num_programs(1) - 1)
    def _finalize():
        out = acc_ref[...] * dinv_ref[...] + b_ref[...].astype(jnp.float32)
        if activate:
            out = jnp.maximum(out, 0.0)
        o_ref[...] = out.astype(o_ref.dtype)


def _aggregate(adj, xw, dinv, b, activate, out_dtype):
    M, K = adj.shape          # M = dst nodes (padded), K = src nodes (padded)
    _, H = xw.shape
    grid = (M // _TM, K // _TK)
    kernel = functools.partial(_aggregate_kernel, activate=activate)
    return pl.pallas_call(
        kernel,
        out_shape=jax.ShapeDtypeStruct((M, H), out_dtype),
        grid_spec=pltpu.PrefetchScalarGridSpec(
            num_scalar_prefetch=0,
            grid=grid,
            in_specs=[
                pl.BlockSpec((_TM, _TK), lambda i, k: (i, k)),
                pl.BlockSpec((_TK, H), lambda i, k: (k, 0)),
                pl.BlockSpec((_TM, 1), lambda i, k: (i, 0)),
                pl.BlockSpec((1, H), lambda i, k: (0, 0)),
            ],
            out_specs=pl.BlockSpec((_TM, H), lambda i, k: (i, 0)),
            scratch_shapes=[pltpu.VMEM((_TM, H), jnp.float32)],
        ),
        compiler_params=pltpu.CompilerParams(
            dimension_semantics=("parallel", "arbitrary"),
            vmem_limit_bytes=_VMEM_LIMIT_BYTES),
    )(adj, xw, dinv, b)


# ---------------------------------------------------------------------------
# Forward pass wrapper: pad to 128-aligned shapes, precompute D^{-1/2}, run the
# two streamed GCN layers, slice off padding, avg-readout in XLA.
# NOTE: adjacency is assumed symmetric (undirected graph), so row-sum degree
# matches DGL norm='both' for both src and dst normalization.
# ---------------------------------------------------------------------------
def graph_encoder_forward(adj, x, w1, b1, w2, b2, *, compute_dtype=jnp.bfloat16):
    """Returns (pool_x, all_outputs) like GraphEncoder.forward (eval mode)."""
    N = adj.shape[0]
    F_in = x.shape[1]
    H = w1.shape[1]
    O = w2.shape[1]

    Np = _round_up(N, _TM)
    Fp = _round_up(F_in, 128)
    Hp = _round_up(H, 128)
    Op = _round_up(O, 128)

    adj_f32 = adj.astype(jnp.float32)
    adj_p = jnp.pad(adj_f32, ((0, Np - N), (0, Np - N)))
    x_p = jnp.pad(x.astype(jnp.float32), ((0, Np - N), (0, Fp - F_in)))
    w1_p = jnp.pad(w1.astype(jnp.float32), ((0, Fp - F_in), (0, Hp - H)))
    b1_p = jnp.pad(b1.astype(jnp.float32).reshape(1, H), ((0, 0), (0, Hp - H)))
    w2_p = jnp.pad(w2.astype(jnp.float32), ((0, Hp - H), (0, Op - O)))
    b2_p = jnp.pad(b2.astype(jnp.float32).reshape(1, O), ((0, 0), (0, Op - O)))

    # D^{-1/2} with DGL's clamp-at-1, computed once outside the kernels (f32).
    deg = jnp.maximum(jnp.sum(adj_p, axis=1, keepdims=True), 1.0)
    dinv = jax.lax.rsqrt(deg)                                    # (Np, 1) f32

    cd = compute_dtype
    adj_c = adj_p.astype(cd)      # 0/1 entries: exact in bf16
    x_c = x_p.astype(cd)
    w1_c = w1_p.astype(cd)
    w2_c = w2_p.astype(cd)

    # Layer 1 (weight-first):  H1 = ReLU( dinv ⊙ (A @ (dinv ⊙ (X @ W1))) + b1 )
    xw1s = _matmul_rowscale(x_c, w1_c, dinv, cd)
    h1 = _aggregate(adj_c, xw1s, dinv, b1_p, activate=True, out_dtype=cd)

    # Layer 2 (no activation, f32 node output):
    xw2s = _matmul_rowscale(h1, w2_c, dinv, cd)
    h2 = _aggregate(adj_c, xw2s, dinv, b2_p, activate=False, out_dtype=jnp.float32)

    nodes = h2[:N, :O]                                           # all_outputs
    pool = jnp.mean(nodes, axis=0, keepdims=True)                # avg readout
    return pool, nodes


# ---------------------------------------------------------------------------
# Pure-JAX reference (matches the PyTorch module's math, f32).
# ---------------------------------------------------------------------------
def _reference(adj, x, w1, b1, w2, b2):
    deg = jnp.maximum(jnp.sum(adj, axis=1, keepdims=True), 1.0)
    dinv = 1.0 / jnp.sqrt(deg)

    def layer(h, w, b):
        return ((adj @ (h * dinv)) * dinv) @ w + b

    h1 = jnp.maximum(layer(x, w1, b1), 0.0)
    h2 = layer(h1, w2, b2)
    return jnp.mean(h2, axis=0, keepdims=True), h2


if __name__ == "__main__":
    # Small shapes consistent with the module (scaled down from 1433/512/512);
    # N=200 deliberately non-128-aligned to exercise the padding path.
    N = 200        # number of nodes
    F_IN = 256     # input_size
    HID = 128      # hidden_size
    OUT = 128      # output_size

    key = jax.random.PRNGKey(0)
    k_adj, k_x, k_w1, k_b1, k_w2, k_b2 = jax.random.split(key, 6)

    # Deterministic synthetic graph: random symmetric adjacency + self loops.
    a = (jax.random.uniform(k_adj, (N, N)) < 0.1).astype(jnp.float32)
    adj = jnp.maximum(a, a.T)
    adj = jnp.maximum(adj, jnp.eye(N, dtype=jnp.float32))        # degree >= 1

    x = jax.random.normal(k_x, (N, F_IN), dtype=jnp.float32)
    w1 = jax.random.normal(k_w1, (F_IN, HID), dtype=jnp.float32) / jnp.sqrt(F_IN)
    b1 = jax.random.normal(k_b1, (1, HID), dtype=jnp.float32) * 0.01
    w2 = jax.random.normal(k_w2, (HID, OUT), dtype=jnp.float32) / jnp.sqrt(HID)
    b2 = jax.random.normal(k_b2, (1, OUT), dtype=jnp.float32) * 0.01

    ref_pool, ref_nodes = _reference(adj, x, w1, b1, w2, b2)

    # f32 compute path: tight correctness check.
    pool_f32, nodes_f32 = graph_encoder_forward(adj, x, w1, b1, w2, b2,
                                                compute_dtype=jnp.float32)
    jax.block_until_ready((pool_f32, nodes_f32))
    assert pool_f32.shape == (1, OUT) and nodes_f32.shape == (N, OUT)
    assert jnp.allclose(nodes_f32, ref_nodes, atol=1e-3, rtol=1e-3)
    assert jnp.allclose(pool_f32, ref_pool, atol=1e-3, rtol=1e-3)

    # bf16 MXU path (fast path): looser tolerance vs the f32 reference.
    pool_bf, nodes_bf = graph_encoder_forward(adj, x, w1, b1, w2, b2,
                                              compute_dtype=jnp.bfloat16)
    jax.block_until_ready((pool_bf, nodes_bf))
    assert pool_bf.shape == (1, OUT) and nodes_bf.shape == (N, OUT)
    assert jnp.allclose(nodes_bf, ref_nodes, atol=5e-2, rtol=5e-2)
    assert jnp.allclose(pool_bf, ref_pool, atol=5e-2, rtol=5e-2)

    print("KERNEL_OK")
</pallas_src>

<mosaic_0001>
module attributes {stable_mosaic.version = 11 : i64} {
  func.func @_matmul_rowscale_kernel(%arg0: i32, %arg1: i32, %arg2: i32, %arg3: memref<128x128xf32, #tpu.memory_space<vmem>>, %arg4: memref<128x128xf32, #tpu.memory_space<vmem>>, %arg5: memref<128x1xf32, #tpu.memory_space<vmem>>, %arg6: memref<128x128xf32, #tpu.memory_space<vmem>>, %arg7: memref<128x128xf32, #tpu.memory_space<vmem>>) attributes {dimension_semantics = [#tpu.dimension_semantics<parallel>, #tpu.dimension_semantics<parallel>, #tpu.dimension_semantics<arbitrary>], iteration_bounds = array<i64: 2, 1, 2>, scalar_prefetch = 0 : i64, scratch_operands = 1 : i64, tpu.core_type = #tpu.core_type<tc>, window_params = [{transform_indices = @transform_0, window_bounds = array<i64: 128, 128>}, {transform_indices = @transform_1, window_bounds = array<i64: 128, 128>}, {transform_indices = @transform_2, window_bounds = array<i64: 128, 1>}, {transform_indices = @transform_3, window_bounds = array<i64: 128, 128>}]} {
    %c0_i32 = arith.constant 0 : i32
    %0 = arith.cmpi eq, %arg2, %c0_i32 : i32
    %1 = arith.extui %0 : i1 to i32
    %c0_i32_0 = arith.constant 0 : i32
    %2 = arith.cmpi ne, %1, %c0_i32_0 : i32
    scf.if %2 {
      %cst_9 = arith.constant 0.000000e+00 : f32
      %12 = vector.broadcast %cst_9 : f32 to vector<128x128xf32>
      %c0_10 = arith.constant 0 : index
      %c0_11 = arith.constant 0 : index
      %13 = vector.load %arg7[%c0_10, %c0_11] : memref<128x128xf32, #tpu.memory_space<vmem>>, vector<128x128xf32>
      tpu.vector_store %arg7[%c0_10, %c0_11], %12 {strides = array<i32>} : memref<128x128xf32, #tpu.memory_space<vmem>>, vector<128x128xf32>,
    } else {
    }
    %c0 = arith.constant 0 : index
    %c0_1 = arith.constant 0 : index
    %3 = vector.load %arg7[%c0, %c0_1] : memref<128x128xf32, #tpu.memory_space<vmem>>, vector<128x128xf32>
    %c0_2 = arith.constant 0 : index
    %c0_3 = arith.constant 0 : index
    %4 = vector.load %arg3[%c0_2, %c0_3] : memref<128x128xf32, #tpu.memory_space<vmem>>, vector<128x128xf32>
    %c0_4 = arith.constant 0 : index
    %c0_5 = arith.constant 0 : index
    %5 = vector.load %arg4[%c0_4, %c0_5] : memref<128x128xf32, #tpu.memory_space<vmem>>, vector<128x128xf32>
    %cst = arith.constant dense<0.000000e+00> : vector<128x128xf32>
    %6 = tpu.matmul %4, %5, %cst {dimension_numbers = #tpu.dot_dimension_numbers<[1], [0], [0], [1], [0, 0, 1, 1], [], []>} : vector<128x128xf32>, vector<128x128xf32>, vector<128x128xf32> -> vector<128x128xf32>
    %7 = arith.addf %3, %6 : vector<128x128xf32>
    %c0_6 = arith.constant 0 : index
    %c0_7 = arith.constant 0 : index
    %8 = vector.load %arg7[%c0_6, %c0_7] : memref<128x128xf32, #tpu.memory_space<vmem>>, vector<128x128xf32>
    tpu.vector_store %arg7[%c0_6, %c0_7], %7 {strides = array<i32>} : memref<128x128xf32, #tpu.memory_space<vmem>>, vector<128x128xf32>,
    %c1_i32 = arith.constant 1 : i32
    %9 = arith.cmpi eq, %arg2, %c1_i32 : i32
    %10 = arith.extui %9 : i1 to i32
    %c0_i32_8 = arith.constant 0 : i32
    %11 = arith.cmpi ne, %10, %c0_i32_8 : i32
    scf.if %11 {
      %c0_9 = arith.constant 0 : index
      %c0_10 = arith.constant 0 : index
      %12 = vector.load %arg7[%c0_9, %c0_10] : memref<128x128xf32, #tpu.memory_space<vmem>>, vector<128x128xf32>
      %c0_11 = arith.constant 0 : index
      %c0_12 = arith.constant 0 : index
      %13 = vector.load %arg5[%c0_11, %c0_12] : memref<128x1xf32, #tpu.memory_space<vmem>>, vector<128x1xf32>
      %14 = vector.broadcast %13 : vector<128x1xf32> to vector<128x128xf32>
      %15 = arith.mulf %12, %14 : vector<128x128xf32>
      %c0_13 = arith.constant 0 : index
      %c0_14 = arith.constant 0 : index
      %16 = vector.load %arg6[%c0_13, %c0_14] : memref<128x128xf32, #tpu.memory_space<vmem>>, vector<128x128xf32>
      tpu.vector_store %arg6[%c0_13, %c0_14], %15 {strides = array<i32>} : memref<128x128xf32, #tpu.memory_space<vmem>>, vector<128x128xf32>,
    } else {
    }
    return
  }
  func.func @transform_0(%arg0: i32, %arg1: i32, %arg2: i32) -> (i32, i32) {
    %c0_i32 = arith.constant 0 : i32
    return %arg0, %arg2 : i32, i32
  }
  func.func @transform_1(%arg0: i32, %arg1: i32, %arg2: i32) -> (i32, i32) {
    %c0_i32 = arith.constant 0 : i32
    return %arg2, %arg1 : i32, i32
  }
  func.func @transform_2(%arg0: i32, %arg1: i32, %arg2: i32) -> (i32, i32) {
    %c0_i32 = arith.constant 0 : i32
    %c0_i32_0 = arith.constant 0 : i32
    return %arg0, %c0_i32 : i32, i32
  }
  func.func @transform_3(%arg0: i32, %arg1: i32, %arg2: i32) -> (i32, i32) {
    %c0_i32 = arith.constant 0 : i32
    return %arg0, %arg1 : i32, i32
  }
}

</mosaic_0001>

<llo_original>
// kernel: tpu_custom_call.1
$region0: #{tpu_custom_call.1}
  #allocation0 [shape = 'u32[]', space=smem, size = 0x4, offset = 0x4, fixed_abs, tag = 'smem constant byte address 0x4 - core index']
  #allocation1 [shape = 'u32[144,128]{1,0:T(1,128)}', space=vmem, size = 0x12000, scoped, tag = 'internal scratch']
  #allocation2 [shape = 'f32[128,128]{1,0:T(8,128)}', space=vmem, size = 0x10000, scoped, tag = 'scratch operand']
  %s0 = inlined_call_operand.hbm [shape: f32[256,256], index: 0, kind: input, shape index: {}]
  %s1 = inlined_call_operand.vmem [shape: f32[256,128], index: 1, kind: input, shape index: {}]
  %s2 = inlined_call_operand.vmem [shape: f32[256,1], index: 2, kind: input, shape index: {}]
  %s3 = inlined_call_operand.hbm [shape: f32[256,128], index: 3, kind: output, shape index: {}]
  %s4 = sld [smem:[#allocation0]]
  $region57: #{tpu_custom_call.1} parent=0
    _
  %s6 = ssub.s32 1, %s4
  %s7 = scalar_select 0, %s6, %s4
  $region1: #{tpu_custom_call.1} parent=0
    #allocation3 [shape = 'u8[131072]{0}', space=vmem, size = 0x20000, scoped, tag = 'input window, operand 0']
    #allocation4 [shape = 's32[2]{0}', space=sflag, size = 0x8, scoped, tag = 'scoped memory for tpu_custom_call.1']
    #allocation5 [shape = 's32[2]{0}', space=sflag, size = 0x8, scoped, tag = 'scoped memory for tpu_custom_call.1']
    #allocation6 [shape = 'u8[131072]{0}', space=vmem, size = 0x20000, scoped, tag = 'output window, operand 0']
    %8 = vsyncpa [#allocation4], 0
    %s9 = scalar_lea.sflag [#allocation4], 1
    %10 = vsyncpa %s9, 0
    %11 = vsyncpa [#allocation5], 0
    %s12 = scalar_lea.sflag [#allocation5], 1
    %13 = vsyncpa %s12, 0
    loop: start=0, step=1, limit=6
    $region2: #{tpu_custom_call.1} parent=1 // loop_pre_header
      _
    $region3: #{tpu_custom_call.1} parent=1 // loop_header
      %s15 = sphi 0, %s19
      %p16 = scmp.ge.s32.totalorder %s15, 6
      %s22 = sphi 0, %s41
      %s23 = sphi 0, %s37
      %s24 = sphi 0, %s33
      %s25 = sphi 0, %s22
      %s26 = sphi 0, %s23
      %s27 = sphi 0, %s24
      %s28 = sphi 0, %s25
      %s29 = sphi 0, %s26
      %s30 = sphi 0, %s27
      %s46 = sphi 0, %s48
      %s49 = sphi 0, %s46
      %s50 = sphi 0, %s49
      %s66 = sphi 0, %s50
      %s74 = sphi 0, %s76
      %s77 = sphi 0, %s74
      %s78 = sphi 0, %s77
      %s94 = sphi 0, %s78
      %s100 = sphi 0, %s102
      %s103 = sphi 0, %s100
      %s104 = sphi 0, %s103
      %s120 = sphi 0, %s104
      %s128 = sphi 0, %s130
      %s131 = sphi 0, %s128
      %s132 = sphi 0, %s131
      %s148 = sphi 0, %s132
    $region4: #{tpu_custom_call.1} parent=1 // loop_header_branch
      %18 = sbr.rel (%p16) target = $region8
    $region5: #{tpu_custom_call.1} parent=1 // loop_body
      %s20 = ssub.s32 %s15, 1
      %s21 = ssub.s32 %s15, 2
      %s31 = sadd.s32 1, %s24
      %p32 = scmp.ge.s32.totalorder %s31, 2
      %s33 = scalar_select %p32, 0, %s31
      %s34 = sadd.s32 1, %s23
      %s35 = scalar_select %p32, %s34, %s23
      %p36 = scmp.ge.s32.totalorder %s35, 1
      %s37 = scalar_select %p36, 0, %s35
      %s38 = sadd.s32 1, %s22
      %s39 = scalar_select %p36, %s38, %s22
      %p40 = scmp.ge.s32.totalorder %s39, 2
      %s41 = scalar_select %p40, 0, %s39
      %s42 = ssub.s32 %s22, %s41
      %s43 = ssub.s32 %s24, %s33
      %s44 = sor.u32 %s42, %s43
      %p45 = scmp.eq.s32.totalorder %s44, 0
      %s47 = sadd.s32 %s46, 1
      %s48 = scalar_select %p45, %s46, %s47
      %p51 = pneg %p45
      %p52 = scmp.eq.s32.totalorder %s15, 3
      %p53 = por %p51, %p52
      %p54 = scmp.ne.s32.totalorder %s46, %s49
      %p55 = scmp.eq.s32.totalorder %s15, 0
      %p56 = por %p54, %p55
      %p57 = scmp.ne.s32.totalorder %s46, %s49
      %p58 = scmp.eq.s32.totalorder %s20, 3
      %p59 = por %p57, %p58
      %p60 = scmp.ne.s32.totalorder %s49, %s50
      %p61 = scmp.eq.s32.totalorder %s20, 0
      %p62 = por %p60, %p61
      %p63 = scmp.ne.s32.totalorder %s49, %s50
      %p64 = scmp.eq.s32.totalorder %s21, 3
      %p65 = por %p63, %p64
      %p67 = scmp.ne.s32.totalorder %s50, %s66
      %p68 = scmp.eq.s32.totalorder %s21, 0
      %p69 = por %p67, %p68
      %s70 = ssub.s32 %s24, %s33
      %s71 = ssub.s32 %s23, %s37
      %s72 = sor.u32 %s70, %s71
      %p73 = scmp.eq.s32.totalorder %s72, 0
      %s75 = sadd.s32 %s74, 1
      %s76 = scalar_select %p73, %s74, %s75
      %p79 = pneg %p73
      %p80 = scmp.eq.s32.totalorder %s15, 3
      %p81 = por %p79, %p80
      %p82 = scmp.ne.s32.totalorder %s74, %s77
      %p83 = scmp.eq.s32.totalorder %s15, 0
      %p84 = por %p82, %p83
      %p85 = scmp.ne.s32.totalorder %s74, %s77
      %p86 = scmp.eq.s32.totalorder %s20, 3
      %p87 = por %p85, %p86
      %p88 = scmp.ne.s32.totalorder %s77, %s78
      %p89 = scmp.eq.s32.totalorder %s20, 0
      %p90 = por %p88, %p89
      %p91 = scmp.ne.s32.totalorder %s77, %s78
      %p92 = scmp.eq.s32.totalorder %s21, 3
      %p93 = por %p91, %p92
      %p95 = scmp.ne.s32.totalorder %s78, %s94
      %p96 = scmp.eq.s32.totalorder %s21, 0
      %p97 = por %p95, %p96
      %s98 = ssub.s32 %s22, %s41
      %p99 = scmp.eq.s32.totalorder %s98, 0
      %s101 = sadd.s32 %s100, 1
      %s102 = scalar_select %p99, %s100, %s101
      %p105 = pneg %p99
      %p106 = scmp.eq.s32.totalorder %s15, 3
      %p107 = por %p105, %p106
      %p108 = scmp.ne.s32.totalorder %s100, %s103
      %p109 = scmp.eq.s32.totalorder %s15, 0
      %p110 = por %p108, %p109
      %p111 = scmp.ne.s32.totalorder %s100, %s103
      %p112 = scmp.eq.s32.totalorder %s20, 3
      %p113 = por %p111, %p112
      %p114 = scmp.ne.s32.totalorder %s103, %s104
      %p115 = scmp.eq.s32.totalorder %s20, 0
      %p116 = por %p114, %p115
      %p117 = scmp.ne.s32.totalorder %s103, %s104
      %p118 = scmp.eq.s32.totalorder %s21, 3
      %p119 = por %p117, %p118
      %p121 = scmp.ne.s32.totalorder %s104, %s120
      %p122 = scmp.eq.s32.totalorder %s21, 0
      %p123 = por %p121, %p122
      %s124 = ssub.s32 %s22, %s41
      %s125 = ssub.s32 %s23, %s37
      %s126 = sor.u32 %s124, %s125
      %p127 = scmp.eq.s32.totalorder %s126, 0
      %s129 = sadd.s32 %s128, 1
      %s130 = scalar_select %p127, %s128, %s129
      %p133 = pneg %p127
      %p134 = scmp.eq.s32.totalorder %s15, 3
      %p135 = por %p133, %p134
      %p136 = scmp.ne.s32.totalorder %s128, %s131
      %p137 = scmp.eq.s32.totalorder %s15, 0
      %p138 = por %p136, %p137
      %p139 = scmp.ne.s32.totalorder %s128, %s131
      %p140 = scmp.eq.s32.totalorder %s20, 3
      %p141 = por %p139, %p140
      %p142 = scmp.ne.s32.totalorder %s131, %s132
      %p143 = scmp.eq.s32.totalorder %s20, 0
      %p144 = por %p142, %p143
      %p145 = scmp.ne.s32.totalorder %s131, %s132
      %p146 = scmp.eq.s32.totalorder %s21, 3
      %p147 = por %p145, %p146
      %p149 = scmp.ne.s32.totalorder %s132, %s148
      %p150 = scmp.eq.s32.totalorder %s21, 0
      %p151 = por %p149, %p150
      %p152 = scmp.le.s32.totalorder 1, %s15
      %p153 = scmp.lt.s32.totalorder %s15, 5
      %p154 = pnand %p152, %p153
      %p155 = pneg %p154
      // Predicated region
      $region9: #{tpu_custom_call.1} parent=5 // pred_check
        _
      $region10: #{tpu_custom_call.1} parent=5 // pred_check_branch
        %157 = sbr.rel (%p154) target = $region12
      $region11: #{tpu_custom_call.1} parent=5 // pred_region
        %s158 = ssub.s32 %s15, 1
      $region12: #{tpu_custom_call.1} parent=5 // pred_fallthru
        _
      %p159 = scmp.lt.s32.totalorder %s15, 4
      // Predicated region
      $region13: #{tpu_custom_call.1} parent=5 // pred_check
        %p160 = pneg %p159
      $region14: #{tpu_custom_call.1} parent=5 // pred_check_branch
        %162 = sbr.rel (%p160) target = $region16
      $region15: #{tpu_custom_call.1} parent=5 // pred_region
        // Predicated region
        $region17: #{tpu_custom_call.1} parent=15 // pred_check
          %p163 = pneg %p56
        $region18: #{tpu_custom_call.1} parent=15 // pred_check_branch
          %165 = sbr.rel (%p163) target = $region20
        $region19: #{tpu_custom_call.1} parent=15 // pred_region
          %s166 = sand.u32 %s46, 1
          %s167 = scalar_lea.sflag [#allocation4], %s166
          %s168 = sand.u32 %s46, 1
          %s169 = smul.addr %s168, 128
          %s170 = scalar_lea.vmem [#allocation3], %s169
          %s171 = smul.u32 16, %s22
          %s173 = ssub.s32 2048, 2048
          %174 = vsyncadd %s167, %s173
          %s175 = smul.addr %s171, 2
          %s176 = sadd.s32 %s24, %s175
          %s177 = smul.addr %s176, 128
          %s178 = scalar_lea.hbm %s0, %s177
          %s179 = sshll.u32 %s170, 4
          %s180 = int_to_ptr.vmem [resolvable:$true] %s179
          %185 = dma.hbm_to_vmem [thread:$0]  %s178, 2048, %s180, %s167, 256, 128, 8
        $region20: #{tpu_custom_call.1} parent=15 // pred_fallthru
          _
        // Predicated region
        $region21: #{tpu_custom_call.1} parent=15 // pred_check
          %p186 = pneg %p84
        $region22: #{tpu_custom_call.1} parent=15 // pred_check_branch
          %188 = sbr.rel (%p186) target = $region24
        $region23: #{tpu_custom_call.1} parent=15 // pred_region
          %s189 = smul.u32 16, %s24
          %p190 = scmp.lt.s32.totalorder %s189, 31
          %s191 = scalar_select %p190, %s189, 31
          %p192 = scmp.lt.s32.totalorder %s23, 0
          %s193 = scalar_select %p192, %s23, 0
          %s194 = sadd.s32 %s193, %s191
          %s195 = smul.addr %s194, 8
          %s196 = scalar_lea.vmem %s1, %s195
          %s197 = smul.u32 16, %s24
        $region24: #{tpu_custom_call.1} parent=15 // pred_fallthru
          _
        // Predicated region
        $region25: #{tpu_custom_call.1} parent=15 // pred_check
          %p198 = pneg %p110
        $region26: #{tpu_custom_call.1} parent=15 // pred_check_branch
          %200 = sbr.rel (%p198) target = $region28
        $region27: #{tpu_custom_call.1} parent=15 // pred_region
          %s201 = smul.u32 16, %s22
          %p202 = scmp.lt.s32.totalorder %s201, 31
          %s203 = scalar_select %p202, %s201, 31
          %s204 = smul.addr %s203, 8
          %s205 = scalar_lea.vmem %s2, %s204
          %s206 = smul.u32 16, %s22
        $region28: #{tpu_custom_call.1} parent=15 // pred_fallthru
          _
      $region16: #{tpu_custom_call.1} parent=5 // pred_fallthru
        _
      %p207 = scmp.le.s32.totalorder 1, %s15
      %p208 = scmp.lt.s32.totalorder %s15, 5
      %p209 = pnand %p207, %p208
      %p210 = pneg %p209
      // Predicated region
      $region29: #{tpu_custom_call.1} parent=5 // pred_check
        _
      $region30: #{tpu_custom_call.1} parent=5 // pred_check_branch
        %212 = sbr.rel (%p209) target = $region32
      $region31: #{tpu_custom_call.1} parent=5 // pred_region
        %s213 = ssub.s32 %s15, 1
        %s214 = sand.u32 %s49, 1
        %s215 = scalar_lea.sflag [#allocation4], %s214
        %s216 = sand.u32 %s49, 1
        %s217 = smul.addr %s216, 128
        %s218 = scalar_lea.vmem [#allocation3], %s217
        // Predicated region
        $region33: #{tpu_custom_call.1} parent=31 // pred_check
          %p219 = pneg %p62
        $region34: #{tpu_custom_call.1} parent=31 // pred_check_branch
          %221 = sbr.rel (%p219) target = $region36
        $region35: #{tpu_custom_call.1} parent=31 // pred_region
          %222 = dma.done %s215, 2048
        $region36: #{tpu_custom_call.1} parent=31 // pred_fallthru
          _
        %s223 = sand.u32 %s49, 1
        %s224 = scalar_lea.sflag [#allocation4], %s223
        %s225 = sand.u32 %s49, 1
        %s226 = smul.addr %s225, 128
        %s227 = scalar_lea.vmem [#allocation3], %s226
        %p228 = pneg %p62
        %p229 = pneg %p59
        %s230 = smul.u32 16, %s27
        %p231 = scmp.lt.s32.totalorder %s230, 31
        %s232 = scalar_select %p231, %s230, 31
        %p233 = scmp.lt.s32.totalorder %s26, 0
        %s234 = scalar_select %p233, %s26, 0
        %s235 = sadd.s32 %s234, %s232
        %s236 = smul.addr %s235, 8
        %s237 = scalar_lea.vmem %s1, %s236
        %p238 = pneg %p90
        %p239 = pneg %p87
        %s240 = smul.u32 16, %s25
        %p241 = scmp.lt.s32.totalorder %s240, 31
        %s242 = scalar_select %p241, %s240, 31
        %s243 = smul.addr %s242, 8
        %s244 = scalar_lea.vmem %s2, %s243
        %p245 = pneg %p116
        %p246 = pneg %p113
        %p247 = pneg %p144
        %p248 = pneg %p141
        %s249 = sand.u32 %s131, 1
        %s250 = scalar_lea.sflag [#allocation5], %s249
        %s251 = sand.u32 %s131, 1
        %s252 = smul.addr %s251, 128
        %s253 = scalar_lea.vmem [#allocation6], %s252
        %s254 = smul.u32 16, %s25
        %s255 = smul.u32 16, %s27
        %p256 = scmp.lt.s32.totalorder %s255, 31
        %s257 = scalar_select %p256, %s255, 31
        %p258 = scmp.lt.s32.totalorder %s26, 0
        %s259 = scalar_select %p258, %s26, 0
        %s260 = sadd.s32 %s259, %s257
        %s261 = smul.addr %s260, 8
        %s262 = scalar_lea.vmem %s1, %s261
        %s263 = smul.u32 16, %s27
        %s264 = smul.u32 16, %s25
        %p265 = scmp.lt.s32.totalorder %s264, 31
        %s266 = scalar_select %p265, %s264, 31
        %s267 = smul.addr %s266, 8
        %s268 = scalar_lea.vmem %s2, %s267
        %s269 = smul.u32 16, %s25
        %s270 = smul.u32 16, %s25
        %p271 = scmp.eq.s32.totalorder %s27, 0
        // Predicated region
        $region37: #{tpu_custom_call.1} parent=31 // pred_check
          %p272 = pneg %p271
        $region38: #{tpu_custom_call.1} parent=31 // pred_check_branch
          %274 = sbr.rel (%p272) target = $region40
        $region39: #{tpu_custom_call.1} parent=31 // pred_region
          %275 = vst [vmem:[#allocation2] sm:$0xff] 0.0
          %276 = vst [vmem:[#allocation2 + $0x8] sm:$0xff] 0.0
          %277 = vst [vmem:[#allocation2 + $0x10] sm:$0xff] 0.0
          %278 = vst [vmem:[#allocation2 + $0x18] sm:$0xff] 0.0
          %279 = vst [vmem:[#allocation2 + $0x20] sm:$0xff] 0.0
          %280 = vst [vmem:[#allocation2 + $0x28] sm:$0xff] 0.0
          %281 = vst [vmem:[#allocation2 + $0x30] sm:$0xff] 0.0
          %282 = vst [vmem:[#allocation2 + $0x38] sm:$0xff] 0.0
          %283 = vst [vmem:[#allocation2 + $0x40] sm:$0xff] 0.0
          %284 = vst [vmem:[#allocation2 + $0x48] sm:$0xff] 0.0
          %285 = vst [vmem:[#allocation2 + $0x50] sm:$0xff] 0.0
          %286 = vst [vmem:[#allocation2 + $0x58] sm:$0xff] 0.0
          %287 = vst [vmem:[#allocation2 + $0x60] sm:$0xff] 0.0
          %288 = vst [vmem:[#allocation2 + $0x68] sm:$0xff] 0.0
          %289 = vst [vmem:[#allocation2 + $0x70] sm:$0xff] 0.0
          %290 = vst [vmem:[#allocation2 + $0x78] sm:$0xff] 0.0
        $region40: #{tpu_custom_call.1} parent=31 // pred_fallthru
          _
        %v291 = vld [vmem:[#allocation2] sm:$0xff]
        %v292 = vld [vmem:[#allocation2 + $0x8] sm:$0xff]
        %v293 = vld [vmem:[#allocation2 + $0x10] sm:$0xff]
        %v294 = vld [vmem:[#allocation2 + $0x18] sm:$0xff]
        %v295 = vld [vmem:[#allocation2 + $0x20] sm:$0xff]
        %v296 = vld [vmem:[#allocation2 + $0x28] sm:$0xff]
        %v297 = vld [vmem:[#allocation2 + $0x30] sm:$0xff]
        %v298 = vld [vmem:[#allocation2 + $0x38] sm:$0xff]
        %v299 = vld [vmem:[#allocation2 + $0x40] sm:$0xff]
        %v300 = vld [vmem:[#allocation2 + $0x48] sm:$0xff]
        %v301 = vld [vmem:[#allocation2 + $0x50] sm:$0xff]
        %v302 = vld [vmem:[#allocation2 + $0x58] sm:$0xff]
        %v303 = vld [vmem:[#allocation2 + $0x60] sm:$0xff]
        %v304 = vld [vmem:[#allocation2 + $0x68] sm:$0xff]
        %v305 = vld [vmem:[#allocation2 + $0x70] sm:$0xff]
        %v306 = vld [vmem:[#allocation2 + $0x78] sm:$0xff]
        %v307 = vld [vmem:[%s218] sm:$0xff]
        %v308 = vld [vmem:[%s218 + $0x8] sm:$0xff]
        %v309 = vld [vmem:[%s218 + $0x10] sm:$0xff]
        %v310 = vld [vmem:[%s218 + $0x18] sm:$0xff]
        %v311 = vld [vmem:[%s218 + $0x20] sm:$0xff]
        %v312 = vld [vmem:[%s218 + $0x28] sm:$0xff]
        %v313 = vld [vmem:[%s218 + $0x30] sm:$0xff]
        %v314 = vld [vmem:[%s218 + $0x38] sm:$0xff]
        %v315 = vld [vmem:[%s218 + $0x40] sm:$0xff]
        %v316 = vld [vmem:[%s218 + $0x48] sm:$0xff]
        %v317 = vld [vmem:[%s218 + $0x50] sm:$0xff]
        %v318 = vld [vmem:[%s218 + $0x58] sm:$0xff]
        %v319 = vld [vmem:[%s218 + $0x60] sm:$0xff]
        %v320 = vld [vmem:[%s218 + $0x68] sm:$0xff]
        %v321 = vld [vmem:[%s218 + $0x70] sm:$0xff]
        %v322 = vld [vmem:[%s218 + $0x78] sm:$0xff]
        %v323 = vld [vmem:[%s262] sm:$0xff]
        %v324 = vld [vmem:[%s262 + $0x8] sm:$0xff]
        %v325 = vld [vmem:[%s262 + $0x10] sm:$0xff]
        %v326 = vld [vmem:[%s262 + $0x18] sm:$0xff]
        %v327 = vld [vmem:[%s262 + $0x20] sm:$0xff]
        %v328 = vld [vmem:[%s262 + $0x28] sm:$0xff]
        %v329 = vld [vmem:[%s262 + $0x30] sm:$0xff]
        %v330 = vld [vmem:[%s262 + $0x38] sm:$0xff]
        %v331 = vld [vmem:[%s262 + $0x40] sm:$0xff]
        %v332 = vld [vmem:[%s262 + $0x48] sm:$0xff]
        %v333 = vld [vmem:[%s262 + $0x50] sm:$0xff]
        %v334 = vld [vmem:[%s262 + $0x58] sm:$0xff]
        %v335 = vld [vmem:[%s262 + $0x60] sm:$0xff]
        %v336 = vld [vmem:[%s262 + $0x68] sm:$0xff]
        %v337 = vld [vmem:[%s262 + $0x70] sm:$0xff]
        %v338 = vld [vmem:[%s262 + $0x78] sm:$0xff]
        %339 = vmatprep.subr.mxu0 0.0
        %340 = vmatpush1.msra.mxu0 %v323
        %341 = vmatprep.subr.mxu0 0.0
        %342 = vmatpush1.msra.mxu0 %v324
        %343 = vmatprep.subr.mxu0 0.0
        %344 = vmatpush1.msra.mxu0 %v325
        %345 = vmatprep.subr.mxu0 0.0
        %346 = vmatpush1.msra.mxu0 %v326
        %347 = vmatprep.subr.mxu0 0.0
        %348 = vmatpush1.msra.mxu0 %v327
        %349 = vmatprep.subr.mxu0 0.0
        %350 = vmatpush1.msra.mxu0 %v328
        %351 = vmatprep.subr.mxu0 0.0
        %352 = vmatpush1.msra.mxu0 %v329
        %353 = vmatprep.subr.mxu0 0.0
        %354 = vmatpush1.msra.mxu0 %v330
        %355 = vmatprep.subr.mxu0 0.0
        %356 = vmatpush1.msra.mxu0 %v331
        %357 = vmatprep.subr.mxu0 0.0
        %358 = vmatpush1.msra.mxu0 %v332
        %359 = vmatprep.subr.mxu0 0.0
        %360 = vmatpush1.msra.mxu0 %v333
        %361 = vmatprep.subr.mxu0 0.0
        %362 = vmatpush1.msra.mxu0 %v334
        %363 = vmatprep.subr.mxu0 0.0
        %364 = vmatpush1.msra.mxu0 %v335
        %365 = vmatprep.subr.mxu0 0.0
        %366 = vmatpush1.msra.mxu0 %v336
        %367 = vmatprep.subr.mxu0 0.0
        %368 = vmatpush1.msra.mxu0 %v337
        %369 = vmatprep.subr.mxu0 0.0
        %370 = vmatpush1.msra.mxu0 %v338
        %371 = vmatprep.subr.mxu0 0.0
        %372 = vmatpush1.msra.mxu0 0.0
        %373 = vmatprep.subr.mxu0 0.0
        %374 = vmatpush1.msra.mxu0 0.0
        %375 = vmatprep.subr.mxu0 0.0
        %376 = vmatpush1.msra.mxu0 0.0
        %377 = vmatprep.subr.mxu0 0.0
        %378 = vmatpush1.msra.mxu0 0.0
        %379 = vmatprep.subr.mxu0 0.0
        %380 = vmatpush1.msra.mxu0 0.0
        %381 = vmatprep.subr.mxu0 0.0
        %382 = vmatpush1.msra.mxu0 0.0
        %383 = vmatprep.subr.mxu0 0.0
        %384 = vmatpush1.msra.mxu0 0.0
        %385 = vmatprep.subr.mxu0 0.0
        %386 = vmatpush1.msra.mxu0 0.0
        %387 = vmatprep.subr.mxu0 0.0
        %388 = vmatpush1.msra.mxu0 0.0
        %389 = vmatprep.subr.mxu0 0.0
        %390 = vmatpush1.msra.mxu0 0.0
        %391 = vmatprep.subr.mxu0 0.0
        %392 = vmatpush1.msra.mxu0 0.0
        %393 = vmatprep.subr.mxu0 0.0
        %394 = vmatpush1.msra.mxu0 0.0
        %395 = vmatprep.subr.mxu0 0.0
        %396 = vmatpush1.msra.mxu0 0.0
        %397 = vmatprep.subr.mxu0 0.0
        %398 = vmatpush1.msra.mxu0 0.0
        %399 = vmatprep.subr.mxu0 0.0
        %400 = vmatpush1.msra.mxu0 0.0
        %401 = vmatprep.subr.mxu0 0.0
        %402 = vmatpush1.msra.mxu0 0.0
        %403 = vmatprep.mubr.f32.mxu0 0.0
        %404 = vmatmul.mubr.f32.gmra.mrb[0].mxu0 %v307
        %v405 = vpop.f32.mrb[0].mxu0
        %v406 = vadd.f32 0.0, %v405
        %v407 = vpop.f32.mrb[0].mxu0
        %408 = vmatprep.mubr.f32.mxu0 0.0
        %409 = vmatmul.mubr.f32.gmra.mrb[0].mxu0 %v308
        %v410 = vpop.f32.mrb[0].mxu0
        %v411 = vadd.f32 0.0, %v410
        %v412 = vpop.f32.mrb[0].mxu0
        %413 = vmatprep.mubr.f32.mxu0 0.0
        %414 = vmatmul.mubr.f32.gmra.mrb[0].mxu0 %v309
        %v415 = vpop.f32.mrb[0].mxu0
        %v416 = vadd.f32 0.0, %v415
        %v417 = vpop.f32.mrb[0].mxu0
        %418 = vmatprep.mubr.f32.mxu0 0.0
        %419 = vmatmul.mubr.f32.gmra.mrb[0].mxu0 %v310
        %v420 = vpop.f32.mrb[0].mxu0
        %v421 = vadd.f32 0.0, %v420
        %v422 = vpop.f32.mrb[0].mxu0
        %423 = vmatprep.mubr.f32.mxu0 0.0
        %424 = vmatmul.mubr.f32.gmra.mrb[0].mxu0 %v311
        %v425 = vpop.f32.mrb[0].mxu0
        %v426 = vadd.f32 0.0, %v425
        %v427 = vpop.f32.mrb[0].mxu0
        %428 = vmatprep.mubr.f32.mxu0 0.0
        %429 = vmatmul.mubr.f32.gmra.mrb[0].mxu0 %v312
        %v430 = vpop.f32.mrb[0].mxu0
        %v431 = vadd.f32 0.0, %v430
        %v432 = vpop.f32.mrb[0].mxu0
        %433 = vmatprep.mubr.f32.mxu0 0.0
        %434 = vmatmul.mubr.f32.gmra.mrb[0].mxu0 %v313
        %v435 = vpop.f32.mrb[0].mxu0
        %v436 = vadd.f32 0.0, %v435
        %v437 = vpop.f32.mrb[0].mxu0
        %438 = vmatprep.mubr.f32.mxu0 0.0
        %439 = vmatmul.mubr.f32.gmra.mrb[0].mxu0 %v314
        %v440 = vpop.f32.mrb[0].mxu0
        %v441 = vadd.f32 0.0, %v440
        %v442 = vpop.f32.mrb[0].mxu0
        %443 = vmatprep.mubr.f32.mxu0 0.0
        %444 = vmatmul.mubr.f32.gmra.mrb[0].mxu0 %v315
        %v445 = vpop.f32.mrb[0].mxu0
        %v446 = vadd.f32 0.0, %v445
        %v447 = vpop.f32.mrb[0].mxu0
        %448 = vmatprep.mubr.f32.mxu0 0.0
        %449 = vmatmul.mubr.f32.gmra.mrb[0].mxu0 %v316
        %v450 = vpop.f32.mrb[0].mxu0
        %v451 = vadd.f32 0.0, %v450
        %v452 = vpop.f32.mrb[0].mxu0
        %453 = vmatprep.mubr.f32.mxu0 0.0
        %454 = vmatmul.mubr.f32.gmra.mrb[0].mxu0 %v317
        %v455 = vpop.f32.mrb[0].mxu0
        %v456 = vadd.f32 0.0, %v455
        %v457 = vpop.f32.mrb[0].mxu0
        %458 = vmatprep.mubr.f32.mxu0 0.0
        %459 = vmatmul.mubr.f32.gmra.mrb[0].mxu0 %v318
        %v460 = vpop.f32.mrb[0].mxu0
        %v461 = vadd.f32 0.0, %v460
        %v462 = vpop.f32.mrb[0].mxu0
        %463 = vmatprep.mubr.f32.mxu0 0.0
        %464 = vmatmul.mubr.f32.gmra.mrb[0].mxu0 %v319
        %v465 = vpop.f32.mrb[0].mxu0
        %v466 = vadd.f32 0.0, %v465
        %v467 = vpop.f32.mrb[0].mxu0
        %468 = vmatprep.mubr.f32.mxu0 0.0
        %469 = vmatmul.mubr.f32.gmra.mrb[0].mxu0 %v320
        %v470 = vpop.f32.mrb[0].mxu0
        %v471 = vadd.f32 0.0, %v470
        %v472 = vpop.f32.mrb[0].mxu0
        %473 = vmatprep.mubr.f32.mxu0 0.0
        %474 = vmatmul.mubr.f32.gmra.mrb[0].mxu0 %v321
        %v475 = vpop.f32.mrb[0].mxu0
        %v476 = vadd.f32 0.0, %v475
        %v477 = vpop.f32.mrb[0].mxu0
        %478 = vmatprep.mubr.f32.mxu0 0.0
        %479 = vmatmul.mubr.f32.gmra.mrb[0].mxu0 %v322
        %v480 = vpop.f32.mrb[0].mxu0
        %v481 = vadd.f32 0.0, %v480
        %v482 = vpop.f32.mrb[0].mxu0
        %483 = vdwg.mxu0
        %v484 = vadd.f32 %v291, %v406
        %v485 = vadd.f32 %v292, %v411
        %v486 = vadd.f32 %v293, %v416
        %v487 = vadd.f32 %v294, %v421
        %v488 = vadd.f32 %v295, %v426
        %v489 = vadd.f32 %v296, %v431
        %v490 = vadd.f32 %v297, %v436
        %v491 = vadd.f32 %v298, %v441
        %v492 = vadd.f32 %v299, %v446
        %v493 = vadd.f32 %v300, %v451
        %v494 = vadd.f32 %v301, %v456
        %v495 = vadd.f32 %v302, %v461
        %v496 = vadd.f32 %v303, %v466
        %v497 = vadd.f32 %v304, %v471
        %v498 = vadd.f32 %v305, %v476
        %v499 = vadd.f32 %v306, %v481
        %500 = vst [vmem:[#allocation2] sm:$0xff] %v484
        %501 = vst [vmem:[#allocation2 + $0x8] sm:$0xff] %v485
        %502 = vst [vmem:[#allocation2 + $0x10] sm:$0xff] %v486
        %503 = vst [vmem:[#allocation2 + $0x18] sm:$0xff] %v487
        %504 = vst [vmem:[#allocation2 + $0x20] sm:$0xff] %v488
        %505 = vst [vmem:[#allocation2 + $0x28] sm:$0xff] %v489
        %506 = vst [vmem:[#allocation2 + $0x30] sm:$0xff] %v490
        %507 = vst [vmem:[#allocation2 + $0x38] sm:$0xff] %v491
        %508 = vst [vmem:[#allocation2 + $0x40] sm:$0xff] %v492
        %509 = vst [vmem:[#allocation2 + $0x48] sm:$0xff] %v493
        %510 = vst [vmem:[#allocation2 + $0x50] sm:$0xff] %v494
        %511 = vst [vmem:[#allocation2 + $0x58] sm:$0xff] %v495
        %512 = vst [vmem:[#allocation2 + $0x60] sm:$0xff] %v496
        %513 = vst [vmem:[#allocation2 + $0x68] sm:$0xff] %v497
        %514 = vst [vmem:[#allocation2 + $0x70] sm:$0xff] %v498
        %515 = vst [vmem:[#allocation2 + $0x78] sm:$0xff] %v499
        %p516 = scmp.eq.s32.totalorder %s27, 1
        // Predicated region
        $region41: #{tpu_custom_call.1} parent=31 // pred_check
          %p517 = pneg %p516
        $region42: #{tpu_custom_call.1} parent=31 // pred_check_branch
          %519 = sbr.rel (%p517) target = $region44
        $region43: #{tpu_custom_call.1} parent=31 // pred_region
          %v520 = vld [vmem:[#allocation2] sm:$0xff]
          %v521 = vld [vmem:[#allocation2 + $0x8] sm:$0xff]
          %v522 = vld [vmem:[#allocation2 + $0x10] sm:$0xff]
          %v523 = vld [vmem:[#allocation2 + $0x18] sm:$0xff]
          %v524 = vld [vmem:[#allocation2 + $0x20] sm:$0xff]
          %v525 = vld [vmem:[#allocation2 + $0x28] sm:$0xff]
          %v526 = vld [vmem:[#allocation2 + $0x30] sm:$0xff]
          %v527 = vld [vmem:[#allocation2 + $0x38] sm:$0xff]
          %v528 = vld [vmem:[#allocation2 + $0x40] sm:$0xff]
          %v529 = vld [vmem:[#allocation2 + $0x48] sm:$0xff]
          %v530 = vld [vmem:[#allocation2 + $0x50] sm:$0xff]
          %v531 = vld [vmem:[#allocation2 + $0x58] sm:$0xff]
          %v532 = vld [vmem:[#allocation2 + $0x60] sm:$0xff]
          %v533 = vld [vmem:[#allocation2 + $0x68] sm:$0xff]
          %v534 = vld [vmem:[#allocation2 + $0x70] sm:$0xff]
          %v535 = vld [vmem:[#allocation2 + $0x78] sm:$0xff]
          %v536 = vld [vmem:[%s268] sm:$0xff]
          %v537 = vld [vmem:[%s268 + $0x8] sm:$0xff]
          %v538 = vld [vmem:[%s268 + $0x10] sm:$0xff]
          %v539 = vld [vmem:[%s268 + $0x18] sm:$0xff]
          %v540 = vld [vmem:[%s268 + $0x20] sm:$0xff]
          %v541 = vld [vmem:[%s268 + $0x28] sm:$0xff]
          %v542 = vld [vmem:[%s268 + $0x30] sm:$0xff]
          %v543 = vld [vmem:[%s268 + $0x38] sm:$0xff]
          %v544 = vld [vmem:[%s268 + $0x40] sm:$0xff]
          %v545 = vld [vmem:[%s268 + $0x48] sm:$0xff]
          %v546 = vld [vmem:[%s268 + $0x50] sm:$0xff]
          %v547 = vld [vmem:[%s268 + $0x58] sm:$0xff]
          %v548 = vld [vmem:[%s268 + $0x60] sm:$0xff]
          %v549 = vld [vmem:[%s268 + $0x68] sm:$0xff]
          %v550 = vld [vmem:[%s268 + $0x70] sm:$0xff]
          %v551 = vld [vmem:[%s268 + $0x78] sm:$0xff]
          %553 = vset.pattern.permute.xlu0 0
          %554 = vperm.xlu0 %553, %v536
          %v555 = vpop.permute.xlu0 %554
          %558 = vset.pattern.permute.xlu0 0
          %559 = vperm.xlu0 %558, %v537
          %v560 = vpop.permute.xlu0 %559
          %563 = vset.pattern.permute.xlu0 0
          %564 = vperm.xlu0 %563, %v538
          %v565 = vpop.permute.xlu0 %564
          %568 = vset.pattern.permute.xlu0 0
          %569 = vperm.xlu0 %568, %v539
          %v570 = vpop.permute.xlu0 %569
          %573 = vset.pattern.permute.xlu0 0
          %574 = vperm.xlu0 %573, %v540
          %v575 = vpop.permute.xlu0 %574
          %578 = vset.pattern.permute.xlu0 0
          %579 = vperm.xlu0 %578, %v541
          %v580 = vpop.permute.xlu0 %579
          %583 = vset.pattern.permute.xlu0 0
          %584 = vperm.xlu0 %583, %v542
          %v585 = vpop.permute.xlu0 %584
          %588 = vset.pattern.permute.xlu0 0
          %589 = vperm.xlu0 %588, %v543
          %v590 = vpop.permute.xlu0 %589
          %593 = vset.pattern.permute.xlu0 0
          %594 = vperm.xlu0 %593, %v544
          %v595 = vpop.permute.xlu0 %594
          %598 = vset.pattern.permute.xlu0 0
          %599 = vperm.xlu0 %598, %v545
          %v600 = vpop.permute.xlu0 %599
          %603 = vset.pattern.permute.xlu0 0
          %604 = vperm.xlu0 %603, %v546
          %v605 = vpop.permute.xlu0 %604
          %608 = vset.pattern.permute.xlu0 0
          %609 = vperm.xlu0 %608, %v547
          %v610 = vpop.permute.xlu0 %609
          %613 = vset.pattern.permute.xlu0 0
          %614 = vperm.xlu0 %613, %v548
          %v615 = vpop.permute.xlu0 %614
          %618 = vset.pattern.permute.xlu0 0
          %619 = vperm.xlu0 %618, %v549
          %v620 = vpop.permute.xlu0 %619
          %623 = vset.pattern.permute.xlu0 0
          %624 = vperm.xlu0 %623, %v550
          %v625 = vpop.permute.xlu0 %624
          %628 = vset.pattern.permute.xlu0 0
          %629 = vperm.xlu0 %628, %v551
          %v630 = vpop.permute.xlu0 %629
          %v632 = vmul.f32 %v520, %v555
          %v633 = vmul.f32 %v521, %v560
          %v634 = vmul.f32 %v522, %v565
          %v635 = vmul.f32 %v523, %v570
          %v636 = vmul.f32 %v524, %v575
          %v637 = vmul.f32 %v525, %v580
          %v638 = vmul.f32 %v526, %v585
          %v639 = vmul.f32 %v527, %v590
          %v640 = vmul.f32 %v528, %v595
          %v641 = vmul.f32 %v529, %v600
          %v642 = vmul.f32 %v530, %v605
          %v643 = vmul.f32 %v531, %v610
          %v644 = vmul.f32 %v532, %v615
          %v645 = vmul.f32 %v533, %v620
          %v646 = vmul.f32 %v534, %v625
          %v647 = vmul.f32 %v535, %v630
          %648 = vst [vmem:[%s253] sm:$0xff] %v632
          %649 = vst [vmem:[%s253 + $0x8] sm:$0xff] %v633
          %650 = vst [vmem:[%s253 + $0x10] sm:$0xff] %v634
          %651 = vst [vmem:[%s253 + $0x18] sm:$0xff] %v635
          %652 = vst [vmem:[%s253 + $0x20] sm:$0xff] %v636
          %653 = vst [vmem:[%s253 + $0x28] sm:$0xff] %v637
          %654 = vst [vmem:[%s253 + $0x30] sm:$0xff] %v638
          %655 = vst [vmem:[%s253 + $0x38] sm:$0xff] %v639
          %656 = vst [vmem:[%s253 + $0x40] sm:$0xff] %v640
          %657 = vst [vmem:[%s253 + $0x48] sm:$0xff] %v641
          %658 = vst [vmem:[%s253 + $0x50] sm:$0xff] %v642
          %659 = vst [vmem:[%s253 + $0x58] sm:$0xff] %v643
          %660 = vst [vmem:[%s253 + $0x60] sm:$0xff] %v644
          %661 = vst [vmem:[%s253 + $0x68] sm:$0xff] %v645
          %662 = vst [vmem:[%s253 + $0x70] sm:$0xff] %v646
          %663 = vst [vmem:[%s253 + $0x78] sm:$0xff] %v647
        $region44: #{tpu_custom_call.1} parent=31 // pred_fallthru
          _
        %s664 = sand.u32 %s131, 1
        %s665 = scalar_lea.sflag [#allocation5], %s664
        %s666 = sand.u32 %s131, 1
        %s667 = smul.addr %s666, 128
        %s668 = scalar_lea.vmem [#allocation6], %s667
        // Predicated region
        $region45: #{tpu_custom_call.1} parent=31 // pred_check
          %p669 = pneg %p141
        $region46: #{tpu_custom_call.1} parent=31 // pred_check_branch
          %671 = sbr.rel (%p669) target = $region48
        $region47: #{tpu_custom_call.1} parent=31 // pred_region
          %s672 = smul.u32 16, %s25
          %s674 = ssub.s32 2048, 2048
          %675 = vsyncadd %s665, %s674
          %s676 = sadd.s32 %s26, %s672
          %s677 = smul.addr %s676, 128
          %s678 = scalar_lea.hbm %s3, %s677
          %s679 = sshll.u32 %s668, 4
          %s680 = int_to_ptr.vmem [resolvable:$true] %s679
          %685 = dma.vmem_to_hbm [thread:$0]  %s680, 2048, %s678, %s665, 128, 128, 8
        $region48: #{tpu_custom_call.1} parent=31 // pred_fallthru
          _
      $region32: #{tpu_custom_call.1} parent=5 // pred_fallthru
        _
      %p686 = scmp.le.s32.totalorder 2, %s15
      // Predicated region
      $region49: #{tpu_custom_call.1} parent=5 // pred_check
        %p687 = pneg %p686
      $region50: #{tpu_custom_call.1} parent=5 // pred_check_branch
        %689 = sbr.rel (%p687) target = $region52
      $region51: #{tpu_custom_call.1} parent=5 // pred_region
        %s690 = ssub.s32 %s15, 2
        // Predicated region
        $region53: #{tpu_custom_call.1} parent=51 // pred_check
          %p691 = pneg %p147
        $region54: #{tpu_custom_call.1} parent=51 // pred_check_branch
          %693 = sbr.rel (%p691) target = $region56
        $region55: #{tpu_custom_call.1} parent=51 // pred_region
          %s694 = sand.u32 %s132, 1
          %s695 = scalar_lea.sflag [#allocation5], %s694
          %s696 = sand.u32 %s132, 1
          %s697 = smul.addr %s696, 128
          %s698 = scalar_lea.vmem [#allocation6], %s697
          %699 = dma.done %s695, 2048
        $region56: #{tpu_custom_call.1} parent=51 // pred_fallthru
          _
      $region52: #{tpu_custom_call.1} parent=5 // pred_fallthru
        _
    $region6: #{tpu_custom_call.1} parent=1 // loop_footer
      %s19 = sadd.s32 1, %s15
    $region7: #{tpu_custom_call.1} parent=1 // loop_footer_branch
      %14 = sbr.rel target = $region3
    $region8: #{tpu_custom_call.1} parent=1 // loop_exit
      _
    %700 = vsyncpa [#allocation4], 1
    %s701 = scalar_lea.sflag [#allocation4], 1
    %702 = vsyncpa %s701, 1
    %703 = vsyncpa [#allocation5], 1
    %s704 = scalar_lea.sflag [#allocation5], 1
    %705 = vsyncpa %s704, 1

</llo_original>
